<compile_context>
chip_gen: v7x
topology: tpu7x:2x2x1
jax: 0.10.0
libtpu: 0.0.40
codegen_flags: <defaults>
</compile_context>

<pallas_src>
import functools

import jax
import jax.numpy as jnp
from jax.experimental import pallas as pl
from jax.experimental.pallas import tpu as pltpu


def _round_up(x, m):
    return (x + m - 1) // m * m


def _critic_kernel(state_ref, action_ref, w1s_ref, w1a_ref, b1_ref,
                   w2_ref, b2_ref, w3_ref, b3_ref, o_ref):
    # Layer 1: split-K matmul over (state | action) -> replaces host-side concat.
    h = jnp.dot(state_ref[...], w1s_ref[...], preferred_element_type=jnp.float32)
    h = h + jnp.dot(action_ref[...], w1a_ref[...], preferred_element_type=jnp.float32)
    h = jnp.maximum(h + b1_ref[...], 0.0)                       # ReLU (VPU)

    # Layer 2
    h = jnp.dot(h, w2_ref[...], preferred_element_type=jnp.float32) + b2_ref[...]
    h = jnp.maximum(h, 0.0)

    # Layer 3: single output unit -> broadcast multiply + lane reduction (XLU)
    # instead of an (H, 1) MXU matmul; bias is an SMEM scalar.
    q = jnp.sum(h * w3_ref[...], axis=-1, keepdims=True) + b3_ref[0, 0]
    o_ref[...] = q.astype(o_ref.dtype)


def critic_forward(state, action, params, *, block_b=512):
    """Pallas-backed Critic forward. state:(B,S), action:(B,A) -> (B,1)."""
    w1s, w1a, b1, w2, b2, w3, b3 = params
    B, S = state.shape
    A = action.shape[1]
    Hp = w2.shape[0]  # lane-padded hidden dim (multiple of 128)

    # Batch tiling: pad B to a multiple of 8 (sublane) and to the tile size.
    Bp = _round_up(B, 8)
    tb = block_b if Bp > block_b else Bp
    Bp = _round_up(Bp, tb)
    if Bp != B:
        pad = Bp - B
        state = jnp.pad(state, ((0, pad), (0, 0)))
        action = jnp.pad(action, ((0, pad), (0, 0)))
    grid = (Bp // tb,)

    d_in = S + A
    cost = pl.CostEstimate(
        flops=2 * Bp * (d_in * Hp + Hp * Hp + Hp),
        transcendentals=0,
        bytes_accessed=4 * (Bp * (S + A + 1) + (d_in + Hp + 3) * Hp + 1),
    )

    batch_spec = lambda n: pl.BlockSpec((tb, n), lambda i: (i, 0))
    # Weights/biases: constant block index -> loaded once, pinned in VMEM.
    pinned = lambda a: pl.BlockSpec(a.shape, lambda i: (0, 0))

    out = pl.pallas_call(
        _critic_kernel,
        out_shape=jax.ShapeDtypeStruct((Bp, 1), jnp.float32),
        grid=grid,
        in_specs=[
            batch_spec(S),                                        # state
            batch_spec(A),                                        # action
            pinned(w1s), pinned(w1a), pinned(b1),                 # layer 1
            pinned(w2), pinned(b2),                               # layer 2
            pinned(w3),                                           # layer 3 row
            pl.BlockSpec(memory_space=pltpu.MemorySpace.SMEM),    # b3 scalar
        ],
        out_specs=pl.BlockSpec((tb, 1), lambda i: (i, 0)),
        compiler_params=pltpu.CompilerParams(
            dimension_semantics=("parallel",)),
        cost_estimate=cost,
    )(state, action, w1s, w1a, b1, w2, b2, w3, b3)

    return out[:B] if Bp != B else out


def init_critic_params(key, state_dim, action_dim, hidden_dim=128, init_w=0.003):
    """Mirrors PyTorch init: uniform(+-1/sqrt(fan_in)) for linear1/2,
    uniform(+-init_w) for linear3. Hidden dim is zero-padded to a multiple of
    128 (padding is inert). w1 is pre-split into state/action halves."""
    k1, k2, k3, k4, k5, k6 = jax.random.split(key, 6)
    d_in = state_dim + action_dim
    hp = _round_up(hidden_dim, 128)

    def u(k, shape, bound):
        return jax.random.uniform(k, shape, jnp.float32, -bound, bound)

    bnd1 = 1.0 / float(d_in) ** 0.5
    bnd2 = 1.0 / float(hidden_dim) ** 0.5

    w1 = jnp.zeros((d_in, hp), jnp.float32).at[:, :hidden_dim].set(
        u(k1, (d_in, hidden_dim), bnd1))
    b1 = jnp.zeros((1, hp), jnp.float32).at[:, :hidden_dim].set(
        u(k2, (1, hidden_dim), bnd1))
    w2 = jnp.zeros((hp, hp), jnp.float32).at[:hidden_dim, :hidden_dim].set(
        u(k3, (hidden_dim, hidden_dim), bnd2))
    b2 = jnp.zeros((1, hp), jnp.float32).at[:, :hidden_dim].set(
        u(k4, (1, hidden_dim), bnd2))
    w3 = jnp.zeros((1, hp), jnp.float32).at[:, :hidden_dim].set(
        u(k5, (1, hidden_dim), init_w))        # layer-3 weight stored as a row
    b3 = u(k6, (1, 1), init_w)

    w1s, w1a = w1[:state_dim], w1[state_dim:]
    return (w1s, w1a, b1, w2, b2, w3, b3)


def _reference_forward(state, action, params):
    w1s, w1a, b1, w2, b2, w3, b3 = params
    mm = functools.partial(jnp.matmul, precision=jax.lax.Precision.HIGHEST)
    x = jnp.concatenate([state, action], axis=1)
    w1 = jnp.concatenate([w1s, w1a], axis=0)
    h = jnp.maximum(mm(x, w1) + b1, 0.0)
    h = jnp.maximum(mm(h, w2) + b2, 0.0)
    return mm(h, w3.T) + b3


if __name__ == "__main__":
    key = jax.random.PRNGKey(0)
    k_s, k_a, k_p = jax.random.split(key, 3)

    batch, state_dim, action_dim, hidden_dim = 8, 12, 4, 32
    state = jax.random.normal(k_s, (batch, state_dim), jnp.float32)
    action = jax.random.normal(k_a, (batch, action_dim), jnp.float32)
    params = init_critic_params(k_p, state_dim, action_dim, hidden_dim)

    out = critic_forward(state, action, params)
    out = jax.block_until_ready(out)

    ref = _reference_forward(state, action, params)
    assert out.shape == (batch, 1)
    assert jnp.allclose(out, ref, atol=1e-4, rtol=1e-4)
    print("KERNEL_OK")
</pallas_src>

<mosaic_0001>
module attributes {stable_mosaic.version = 11 : i64} {
  func.func @_critic_kernel(%arg0: i32, %arg1: memref<8x12xf32, #tpu.memory_space<vmem>>, %arg2: memref<8x4xf32, #tpu.memory_space<vmem>>, %arg3: memref<12x128xf32, #tpu.memory_space<vmem>>, %arg4: memref<4x128xf32, #tpu.memory_space<vmem>>, %arg5: memref<1x128xf32, #tpu.memory_space<vmem>>, %arg6: memref<128x128xf32, #tpu.memory_space<vmem>>, %arg7: memref<1x128xf32, #tpu.memory_space<vmem>>, %arg8: memref<1x128xf32, #tpu.memory_space<vmem>>, %arg9: memref<1x1xf32, #tpu.memory_space<smem>>, %arg10: memref<8x1xf32, #tpu.memory_space<vmem>>) attributes {dimension_semantics = [#tpu.dimension_semantics<parallel>], iteration_bounds = array<i64: 1>, scalar_prefetch = 0 : i64, scratch_operands = 0 : i64, tpu.core_type = #tpu.core_type<tc>, window_params = [{transform_indices = @transform_0, window_bounds = array<i64: 8, 12>}, {transform_indices = @transform_1, window_bounds = array<i64: 8, 4>}, {pipeline_mode = #tpu.pipeline_mode<synchronous>, transform_indices = @transform_2, window_bounds = array<i64: 12, 128>}, {pipeline_mode = #tpu.pipeline_mode<synchronous>, transform_indices = @transform_3, window_bounds = array<i64: 4, 128>}, {pipeline_mode = #tpu.pipeline_mode<synchronous>, transform_indices = @transform_4, window_bounds = array<i64: 1, 128>}, {pipeline_mode = #tpu.pipeline_mode<synchronous>, transform_indices = @transform_5, window_bounds = array<i64: 128, 128>}, {pipeline_mode = #tpu.pipeline_mode<synchronous>, transform_indices = @transform_6, window_bounds = array<i64: 1, 128>}, {pipeline_mode = #tpu.pipeline_mode<synchronous>, transform_indices = @transform_7, window_bounds = array<i64: 1, 128>}, {transform_indices = @transform_8, window_bounds = array<i64: 1, 1>}, {transform_indices = @transform_9, window_bounds = array<i64: 8, 1>}]} {
    %c0 = arith.constant 0 : index
    %c0_0 = arith.constant 0 : index
    %0 = vector.load %arg1[%c0, %c0_0] : memref<8x12xf32, #tpu.memory_space<vmem>>, vector<8x12xf32>
    %c0_1 = arith.constant 0 : index
    %c0_2 = arith.constant 0 : index
    %1 = vector.load %arg3[%c0_1, %c0_2] : memref<12x128xf32, #tpu.memory_space<vmem>>, vector<12x128xf32>
    %cst = arith.constant dense<0.000000e+00> : vector<8x128xf32>
    %2 = tpu.matmul %0, %1, %cst {dimension_numbers = #tpu.dot_dimension_numbers<[1], [0], [0], [1], [0, 0, 1, 1], [], []>} : vector<8x12xf32>, vector<12x128xf32>, vector<8x128xf32> -> vector<8x128xf32>
    %c0_3 = arith.constant 0 : index
    %c0_4 = arith.constant 0 : index
    %3 = vector.load %arg2[%c0_3, %c0_4] : memref<8x4xf32, #tpu.memory_space<vmem>>, vector<8x4xf32>
    %c0_5 = arith.constant 0 : index
    %c0_6 = arith.constant 0 : index
    %4 = vector.load %arg4[%c0_5, %c0_6] : memref<4x128xf32, #tpu.memory_space<vmem>>, vector<4x128xf32>
    %cst_7 = arith.constant dense<0.000000e+00> : vector<8x128xf32>
    %5 = tpu.matmul %3, %4, %cst_7 {dimension_numbers = #tpu.dot_dimension_numbers<[1], [0], [0], [1], [0, 0, 1, 1], [], []>} : vector<8x4xf32>, vector<4x128xf32>, vector<8x128xf32> -> vector<8x128xf32>
    %6 = arith.addf %2, %5 : vector<8x128xf32>
    %c0_8 = arith.constant 0 : index
    %c0_9 = arith.constant 0 : index
    %7 = vector.load %arg5[%c0_8, %c0_9] : memref<1x128xf32, #tpu.memory_space<vmem>>, vector<1x128xf32>
    %8 = vector.broadcast %7 : vector<1x128xf32> to vector<8x128xf32>
    %9 = arith.addf %6, %8 : vector<8x128xf32>
    %cst_10 = arith.constant 0.000000e+00 : f32
    %10 = vector.broadcast %cst_10 : f32 to vector<8x128xf32>
    %11 = arith.maximumf %9, %10 : vector<8x128xf32>
    %c0_11 = arith.constant 0 : index
    %c0_12 = arith.constant 0 : index
    %12 = vector.load %arg6[%c0_11, %c0_12] : memref<128x128xf32, #tpu.memory_space<vmem>>, vector<128x128xf32>
    %cst_13 = arith.constant dense<0.000000e+00> : vector<8x128xf32>
    %13 = tpu.matmul %11, %12, %cst_13 {dimension_numbers = #tpu.dot_dimension_numbers<[1], [0], [0], [1], [0, 0, 1, 1], [], []>} : vector<8x128xf32>, vector<128x128xf32>, vector<8x128xf32> -> vector<8x128xf32>
    %c0_14 = arith.constant 0 : index
    %c0_15 = arith.constant 0 : index
    %14 = vector.load %arg7[%c0_14, %c0_15] : memref<1x128xf32, #tpu.memory_space<vmem>>, vector<1x128xf32>
    %15 = vector.broadcast %14 : vector<1x128xf32> to vector<8x128xf32>
    %16 = arith.addf %13, %15 : vector<8x128xf32>
    %cst_16 = arith.constant 0.000000e+00 : f32
    %17 = vector.broadcast %cst_16 : f32 to vector<8x128xf32>
    %18 = arith.maximumf %16, %17 : vector<8x128xf32>
    %c0_17 = arith.constant 0 : index
    %c0_18 = arith.constant 0 : index
    %19 = vector.load %arg8[%c0_17, %c0_18] : memref<1x128xf32, #tpu.memory_space<vmem>>, vector<1x128xf32>
    %20 = vector.broadcast %19 : vector<1x128xf32> to vector<8x128xf32>
    %21 = arith.mulf %18, %20 : vector<8x128xf32>
    %cst_19 = arith.constant dense<0.000000e+00> : vector<8xf32>
    %22 = vector.multi_reduction <add>, %21, %cst_19 [1] : vector<8x128xf32> to vector<8xf32>
    %23 = vector.shape_cast %22 : vector<8xf32> to vector<8x1xf32>
    %c0_20 = arith.constant 0 : index
    %c0_21 = arith.constant 0 : index
    %24 = memref.load %arg9[%c0_20, %c0_21] : memref<1x1xf32, #tpu.memory_space<smem>>
    %25 = vector.broadcast %24 : f32 to vector<8x1xf32>
    %26 = arith.addf %23, %25 : vector<8x1xf32>
    %c0_22 = arith.constant 0 : index
    %c0_23 = arith.constant 0 : index
    %27 = vector.load %arg10[%c0_22, %c0_23] : memref<8x1xf32, #tpu.memory_space<vmem>>, vector<8x1xf32>
    tpu.vector_store %arg10[%c0_22, %c0_23], %26 {strides = array<i32>} : memref<8x1xf32, #tpu.memory_space<vmem>>, vector<8x1xf32>,
    return
  }
  func.func @transform_0(%arg0: i32) -> (i32, i32) {
    %c0_i32 = arith.constant 0 : i32
    %c0_i32_0 = arith.constant 0 : i32
    return %arg0, %c0_i32 : i32, i32
  }
  func.func @transform_1(%arg0: i32) -> (i32, i32) {
    %c0_i32 = arith.constant 0 : i32
    %c0_i32_0 = arith.constant 0 : i32
    return %arg0, %c0_i32 : i32, i32
  }
  func.func @transform_2(%arg0: i32) -> (i32, i32) {
    %c0_i32 = arith.constant 0 : i32
    %c0_i32_0 = arith.constant 0 : i32
    %c0_i32_1 = arith.constant 0 : i32
    return %c0_i32, %c0_i32_0 : i32, i32
  }
  func.func @transform_3(%arg0: i32) -> (i32, i32) {
    %c0_i32 = arith.constant 0 : i32
    %c0_i32_0 = arith.constant 0 : i32
    %c0_i32_1 = arith.constant 0 : i32
    return %c0_i32, %c0_i32_0 : i32, i32
  }
  func.func @transform_4(%arg0: i32) -> (i32, i32) {
    %c0_i32 = arith.constant 0 : i32
    %c0_i32_0 = arith.constant 0 : i32
    %c0_i32_1 = arith.constant 0 : i32
    return %c0_i32, %c0_i32_0 : i32, i32
  }
  func.func @transform_5(%arg0: i32) -> (i32, i32) {
    %c0_i32 = arith.constant 0 : i32
    %c0_i32_0 = arith.constant 0 : i32
    %c0_i32_1 = arith.constant 0 : i32
    return %c0_i32, %c0_i32_0 : i32, i32
  }
  func.func @transform_6(%arg0: i32) -> (i32, i32) {
    %c0_i32 = arith.constant 0 : i32
    %c0_i32_0 = arith.constant 0 : i32
    %c0_i32_1 = arith.constant 0 : i32
    return %c0_i32, %c0_i32_0 : i32, i32
  }
  func.func @transform_7(%arg0: i32) -> (i32, i32) {
    %c0_i32 = arith.constant 0 : i32
    %c0_i32_0 = arith.constant 0 : i32
    %c0_i32_1 = arith.constant 0 : i32
    return %c0_i32, %c0_i32_0 : i32, i32
  }
  func.func @transform_8(%arg0: i32) -> (i32, i32) {
    %c0_i32 = arith.constant 0 : i32
    %c0_i32_0 = arith.constant 0 : i32
    %c0_i32_1 = arith.constant 0 : i32
    return %c0_i32, %c0_i32_0 : i32, i32
  }
  func.func @transform_9(%arg0: i32) -> (i32, i32) {
    %c0_i32 = arith.constant 0 : i32
    %c0_i32_0 = arith.constant 0 : i32
    return %arg0, %c0_i32 : i32, i32
  }
}

</mosaic_0001>

<llo_original>
// kernel: tpu_custom_call.1
$region0: #{tpu_custom_call.1}
  #allocation0 [shape = 'u32[]', space=smem, size = 0x4, offset = 0x4, fixed_abs, tag = 'smem constant byte address 0x4 - core index']
  #allocation1 [shape = 'u32[144,128]{1,0:T(1,128)}', space=vmem, size = 0x12000, scoped, tag = 'internal scratch']
  #allocation2 [shape = 'f32[1,1]{1,0:T(1,128)S(6)}', space=smem, size = 0x200, scoped, tag = 'scoped memory for tpu_custom_call.1']
  %s0 = inlined_call_operand.hbm [shape: f32[8,12], index: 0, kind: input, shape index: {}]
  %s1 = inlined_call_operand.vmem [shape: f32[8,4], index: 1, kind: input, shape index: {}]
  %s2 = inlined_call_operand.vmem [shape: f32[12,128], index: 2, kind: input, shape index: {}]
  %s3 = inlined_call_operand.vmem [shape: f32[4,128], index: 3, kind: input, shape index: {}]
  %s4 = inlined_call_operand.vmem [shape: f32[1,128], index: 4, kind: input, shape index: {}]
  %s5 = inlined_call_operand.hbm [shape: f32[128,128], index: 5, kind: input, shape index: {}]
  %s6 = inlined_call_operand.vmem [shape: f32[1,128], index: 6, kind: input, shape index: {}]
  %s7 = inlined_call_operand.vmem [shape: f32[1,128], index: 7, kind: input, shape index: {}]
  %s8 = inlined_call_operand.<no memory space> [shape: f32[1,1], index: 8, kind: input, shape index: {}]
  %s9 = inlined_call_operand.vmem [shape: f32[8,1], index: 9, kind: output, shape index: {}]
  %s10 = sld [smem:[#allocation0]]
  $region54: #{tpu_custom_call.1} parent=0
    _
  %s12 = ssub.s32 1, %s10
  %s13 = scalar_select 0, %s12, %s10
  %14 = sst [smem:[#allocation2]] %s8
  $region1: #{tpu_custom_call.1} parent=0
    #allocation3 [shape = 'u8[4096]{0}', space=vmem, size = 0x1000, scoped, tag = 'input window, operand 0, single buffered']
    #allocation4 [shape = 's32[1]{0}', space=sflag, size = 0x4, scoped, tag = 'scoped memory for tpu_custom_call.1']
    #allocation5 [shape = 'u8[65536]{0}', space=vmem, size = 0x10000, scoped, tag = 'input window, operand 5, single buffered']
    #allocation6 [shape = 's32[1]{0}', space=sflag, size = 0x4, scoped, tag = 'scoped memory for tpu_custom_call.1']
    %15 = vsyncpa [#allocation4], 0
    %16 = vsyncpa [#allocation6], 0
    // Predicated region
    $region2: #{tpu_custom_call.1} parent=1 // pred_check
      _
    $region3: #{tpu_custom_call.1} parent=1 // pred_check_branch
      %18 = sbr.rel (0) target = $region5
    $region4: #{tpu_custom_call.1} parent=1 // pred_region
      %s20 = ssub.s32 128, 128
      %21 = vsyncadd [#allocation4], %s20
      %s23 = sshll.u32 [#allocation3], 4
      %s24 = int_to_ptr.vmem [resolvable:$true] %s23
      %26 = dma.hbm_to_vmem [thread:$0]  %s0, 128, %s24, [#allocation4]
    $region5: #{tpu_custom_call.1} parent=1 // pred_fallthru
      _
    // Predicated region
    $region6: #{tpu_custom_call.1} parent=1 // pred_check
      _
    $region7: #{tpu_custom_call.1} parent=1 // pred_check_branch
      %28 = sbr.rel (0) target = $region9
    $region8: #{tpu_custom_call.1} parent=1 // pred_region
      _
    $region9: #{tpu_custom_call.1} parent=1 // pred_fallthru
      _
    // Predicated region
    $region10: #{tpu_custom_call.1} parent=1 // pred_check
      _
    $region11: #{tpu_custom_call.1} parent=1 // pred_check_branch
      %30 = sbr.rel (0) target = $region13
    $region12: #{tpu_custom_call.1} parent=1 // pred_region
      _
    $region13: #{tpu_custom_call.1} parent=1 // pred_fallthru
      _
    // Predicated region
    $region14: #{tpu_custom_call.1} parent=1 // pred_check
      _
    $region15: #{tpu_custom_call.1} parent=1 // pred_check_branch
      %32 = sbr.rel (0) target = $region17
    $region16: #{tpu_custom_call.1} parent=1 // pred_region
      _
    $region17: #{tpu_custom_call.1} parent=1 // pred_fallthru
      _
    // Predicated region
    $region18: #{tpu_custom_call.1} parent=1 // pred_check
      _
    $region19: #{tpu_custom_call.1} parent=1 // pred_check_branch
      %34 = sbr.rel (0) target = $region21
    $region20: #{tpu_custom_call.1} parent=1 // pred_region
      _
    $region21: #{tpu_custom_call.1} parent=1 // pred_fallthru
      _
    // Predicated region
    $region22: #{tpu_custom_call.1} parent=1 // pred_check
      _
    $region23: #{tpu_custom_call.1} parent=1 // pred_check_branch
      %36 = sbr.rel (0) target = $region25
    $region24: #{tpu_custom_call.1} parent=1 // pred_region
      %s38 = ssub.s32 2048, 2048
      %39 = vsyncadd [#allocation6], %s38
      %s40 = sshll.u32 [#allocation5], 4
      %s41 = int_to_ptr.vmem [resolvable:$true] %s40
      %46 = dma.hbm_to_vmem [thread:$0]  %s5, 2048, %s41, [#allocation6], 128, 128, 8
    $region25: #{tpu_custom_call.1} parent=1 // pred_fallthru
      _
    // Predicated region
    $region26: #{tpu_custom_call.1} parent=1 // pred_check
      _
    $region27: #{tpu_custom_call.1} parent=1 // pred_check_branch
      %48 = sbr.rel (0) target = $region29
    $region28: #{tpu_custom_call.1} parent=1 // pred_region
      _
    $region29: #{tpu_custom_call.1} parent=1 // pred_fallthru
      _
    // Predicated region
    $region30: #{tpu_custom_call.1} parent=1 // pred_check
      _
    $region31: #{tpu_custom_call.1} parent=1 // pred_check_branch
      %50 = sbr.rel (0) target = $region33
    $region32: #{tpu_custom_call.1} parent=1 // pred_region
      _
    $region33: #{tpu_custom_call.1} parent=1 // pred_fallthru
      _
    // Predicated region
    $region34: #{tpu_custom_call.1} parent=1 // pred_check
      _
    $region35: #{tpu_custom_call.1} parent=1 // pred_check_branch
      %52 = sbr.rel (0) target = $region37
    $region36: #{tpu_custom_call.1} parent=1 // pred_region
      _
    $region37: #{tpu_custom_call.1} parent=1 // pred_fallthru
      _
    // Predicated region
    $region38: #{tpu_custom_call.1} parent=1 // pred_check
      _
    $region39: #{tpu_custom_call.1} parent=1 // pred_check_branch
      %54 = sbr.rel (0) target = $region41
    $region40: #{tpu_custom_call.1} parent=1 // pred_region
      %55 = dma.done [#allocation4], 128
    $region41: #{tpu_custom_call.1} parent=1 // pred_fallthru
      _
    // Predicated region
    $region42: #{tpu_custom_call.1} parent=1 // pred_check
      _
    $region43: #{tpu_custom_call.1} parent=1 // pred_check_branch
      %57 = sbr.rel (0) target = $region45
    $region44: #{tpu_custom_call.1} parent=1 // pred_region
      %58 = dma.done [#allocation6], 2048
    $region45: #{tpu_custom_call.1} parent=1 // pred_fallthru
      _
    %v59 = vld [vmem:[#allocation3] sm:$0xff]
    %v60 = vld [vmem:[%s2] sm:$0xff]
    %v61 = vld [vmem:[%s2 + $0x8] sm:$0xf]
    %v62 = vld [vmem:[%s1] sm:$0xff]
    %v63 = vld [vmem:[%s3] sm:$0xf]
    %vm64 = vcmask 31744
    %v66 = vsel %vm64, %v62, 0
    %vm68 = vcmask 1043456
    %v70 = vsel %vm68, %v63, 0
    %72 = vmatprep.subr.mxu0 0.0
    %73 = vmatpush1.msra.mxu0 %v70
    %74 = vmatprep.subr.mxu0 0.0
    %75 = vmatpush1.msra.mxu0 0.0
    %76 = vmatprep.subr.mxu0 0.0
    %77 = vmatpush1.msra.mxu0 0.0
    %78 = vmatprep.subr.mxu0 0.0
    %79 = vmatpush1.msra.mxu0 0.0
    %80 = vmatprep.subr.mxu0 0.0
    %81 = vmatpush1.msra.mxu0 0.0
    %82 = vmatprep.subr.mxu0 0.0
    %83 = vmatpush1.msra.mxu0 0.0
    %84 = vmatprep.subr.mxu0 0.0
    %85 = vmatpush1.msra.mxu0 0.0
    %86 = vmatprep.subr.mxu0 0.0
    %87 = vmatpush1.msra.mxu0 0.0
    %88 = vmatprep.subr.mxu0 0.0
    %89 = vmatpush1.msra.mxu0 0.0
    %90 = vmatprep.subr.mxu0 0.0
    %91 = vmatpush1.msra.mxu0 0.0
    %92 = vmatprep.subr.mxu0 0.0
    %93 = vmatpush1.msra.mxu0 0.0
    %94 = vmatprep.subr.mxu0 0.0
    %95 = vmatpush1.msra.mxu0 0.0
    %96 = vmatprep.subr.mxu0 0.0
    %97 = vmatpush1.msra.mxu0 0.0
    %98 = vmatprep.subr.mxu0 0.0
    %99 = vmatpush1.msra.mxu0 0.0
    %100 = vmatprep.subr.mxu0 0.0
    %101 = vmatpush1.msra.mxu0 0.0
    %102 = vmatprep.subr.mxu0 0.0
    %103 = vmatpush1.msra.mxu0 0.0
    %104 = vmatprep.subr.mxu0 0.0
    %105 = vmatpush1.msra.mxu0 0.0
    %106 = vmatprep.subr.mxu0 0.0
    %107 = vmatpush1.msra.mxu0 0.0
    %108 = vmatprep.subr.mxu0 0.0
    %109 = vmatpush1.msra.mxu0 0.0
    %110 = vmatprep.subr.mxu0 0.0
    %111 = vmatpush1.msra.mxu0 0.0
    %112 = vmatprep.subr.mxu0 0.0
    %113 = vmatpush1.msra.mxu0 0.0
    %114 = vmatprep.subr.mxu0 0.0
    %115 = vmatpush1.msra.mxu0 0.0
    %116 = vmatprep.subr.mxu0 0.0
    %117 = vmatpush1.msra.mxu0 0.0
    %118 = vmatprep.subr.mxu0 0.0
    %119 = vmatpush1.msra.mxu0 0.0
    %120 = vmatprep.subr.mxu0 0.0
    %121 = vmatpush1.msra.mxu0 0.0
    %122 = vmatprep.subr.mxu0 0.0
    %123 = vmatpush1.msra.mxu0 0.0
    %124 = vmatprep.subr.mxu0 0.0
    %125 = vmatpush1.msra.mxu0 0.0
    %126 = vmatprep.subr.mxu0 0.0
    %127 = vmatpush1.msra.mxu0 0.0
    %128 = vmatprep.subr.mxu0 0.0
    %129 = vmatpush1.msra.mxu0 0.0
    %130 = vmatprep.subr.mxu0 0.0
    %131 = vmatpush1.msra.mxu0 0.0
    %132 = vmatprep.subr.mxu0 0.0
    %133 = vmatpush1.msra.mxu0 0.0
    %134 = vmatprep.subr.mxu0 0.0
    %135 = vmatpush1.msra.mxu0 0.0
    %136 = vmatprep.mubr.f32.mxu0 0.0
    %137 = vmatmul.mubr.f32.gmra.mrb[0].mxu0 %v66
    %v138 = vpop.f32.mrb[0].mxu0
    %v139 = vadd.f32 0.0, %v138
    %v140 = vpop.f32.mrb[0].mxu0
    %141 = vdwg.mxu0
    %vm142 = vcmask 97280
    %v144 = vsel %vm142, %v59, 0
    %v147 = vsel %vm68, %v61, 0
    %149 = vmatprep.subr.mxu0 0.0
    %150 = vmatpush1.msra.mxu0 %v60
    %151 = vmatprep.subr.mxu0 0.0
    %152 = vmatpush1.msra.mxu0 %v147
    %153 = vmatprep.subr.mxu0 0.0
    %154 = vmatpush1.msra.mxu0 0.0
    %155 = vmatprep.subr.mxu0 0.0
    %156 = vmatpush1.msra.mxu0 0.0
    %157 = vmatprep.subr.mxu0 0.0
    %158 = vmatpush1.msra.mxu0 0.0
    %159 = vmatprep.subr.mxu0 0.0
    %160 = vmatpush1.msra.mxu0 0.0
    %161 = vmatprep.subr.mxu0 0.0
    %162 = vmatpush1.msra.mxu0 0.0
    %163 = vmatprep.subr.mxu0 0.0
    %164 = vmatpush1.msra.mxu0 0.0
    %165 = vmatprep.subr.mxu0 0.0
    %166 = vmatpush1.msra.mxu0 0.0
    %167 = vmatprep.subr.mxu0 0.0
    %168 = vmatpush1.msra.mxu0 0.0
    %169 = vmatprep.subr.mxu0 0.0
    %170 = vmatpush1.msra.mxu0 0.0
    %171 = vmatprep.subr.mxu0 0.0
    %172 = vmatpush1.msra.mxu0 0.0
    %173 = vmatprep.subr.mxu0 0.0
    %174 = vmatpush1.msra.mxu0 0.0
    %175 = vmatprep.subr.mxu0 0.0
    %176 = vmatpush1.msra.mxu0 0.0
    %177 = vmatprep.subr.mxu0 0.0
    %178 = vmatpush1.msra.mxu0 0.0
    %179 = vmatprep.subr.mxu0 0.0
    %180 = vmatpush1.msra.mxu0 0.0
    %181 = vmatprep.subr.mxu0 0.0
    %182 = vmatpush1.msra.mxu0 0.0
    %183 = vmatprep.subr.mxu0 0.0
    %184 = vmatpush1.msra.mxu0 0.0
    %185 = vmatprep.subr.mxu0 0.0
    %186 = vmatpush1.msra.mxu0 0.0
    %187 = vmatprep.subr.mxu0 0.0
    %188 = vmatpush1.msra.mxu0 0.0
    %189 = vmatprep.subr.mxu0 0.0
    %190 = vmatpush1.msra.mxu0 0.0
    %191 = vmatprep.subr.mxu0 0.0
    %192 = vmatpush1.msra.mxu0 0.0
    %193 = vmatprep.subr.mxu0 0.0
    %194 = vmatpush1.msra.mxu0 0.0
    %195 = vmatprep.subr.mxu0 0.0
    %196 = vmatpush1.msra.mxu0 0.0
    %197 = vmatprep.subr.mxu0 0.0
    %198 = vmatpush1.msra.mxu0 0.0
    %199 = vmatprep.subr.mxu0 0.0
    %200 = vmatpush1.msra.mxu0 0.0
    %201 = vmatprep.subr.mxu0 0.0
    %202 = vmatpush1.msra.mxu0 0.0
    %203 = vmatprep.subr.mxu0 0.0
    %204 = vmatpush1.msra.mxu0 0.0
    %205 = vmatprep.subr.mxu0 0.0
    %206 = vmatpush1.msra.mxu0 0.0
    %207 = vmatprep.subr.mxu0 0.0
    %208 = vmatpush1.msra.mxu0 0.0
    %209 = vmatprep.subr.mxu0 0.0
    %210 = vmatpush1.msra.mxu0 0.0
    %211 = vmatprep.subr.mxu0 0.0
    %212 = vmatpush1.msra.mxu0 0.0
    %213 = vmatprep.mubr.f32.mxu0 0.0
    %214 = vmatmul.mubr.f32.gmra.mrb[0].mxu0 %v144
    %v215 = vpop.f32.mrb[0].mxu0
    %v216 = vadd.f32 %v139, %v215
    %v217 = vpop.f32.mrb[0].mxu0
    %218 = vdwg.mxu0
    %v219 = vld [vmem:[%s4] sm:$0x1]
    %v221 = vlaneseq
    %v222 = vshrl.u32 %v221, 7
    %v223 = vsub.s32 0, %v222
    %v224 = vrot.slane %v219, %v223
    %v226 = vadd.f32 %v216, %v224
    %v227 = vmax.f32 %v226, 0.0
    %v228 = vld [vmem:[#allocation5] sm:$0xff]
    %v229 = vld [vmem:[#allocation5 + $0x8] sm:$0xff]
    %v230 = vld [vmem:[#allocation5 + $0x10] sm:$0xff]
    %v231 = vld [vmem:[#allocation5 + $0x18] sm:$0xff]
    %v232 = vld [vmem:[#allocation5 + $0x20] sm:$0xff]
    %v233 = vld [vmem:[#allocation5 + $0x28] sm:$0xff]
    %v234 = vld [vmem:[#allocation5 + $0x30] sm:$0xff]
    %v235 = vld [vmem:[#allocation5 + $0x38] sm:$0xff]
    %v236 = vld [vmem:[#allocation5 + $0x40] sm:$0xff]
    %v237 = vld [vmem:[#allocation5 + $0x48] sm:$0xff]
    %v238 = vld [vmem:[#allocation5 + $0x50] sm:$0xff]
    %v239 = vld [vmem:[#allocation5 + $0x58] sm:$0xff]
    %v240 = vld [vmem:[#allocation5 + $0x60] sm:$0xff]
    %v241 = vld [vmem:[#allocation5 + $0x68] sm:$0xff]
    %v242 = vld [vmem:[#allocation5 + $0x70] sm:$0xff]
    %v243 = vld [vmem:[#allocation5 + $0x78] sm:$0xff]
    %v244 = vld [vmem:[%s6] sm:$0x1]
    %v246 = vlaneseq
    %v247 = vshrl.u32 %v246, 7
    %v248 = vsub.s32 0, %v247
    %v249 = vrot.slane %v244, %v248
    %251 = vmatprep.subr.mxu0 0.0
    %252 = vmatpush1.msra.mxu0 %v228
    %253 = vmatprep.subr.mxu0 0.0
    %254 = vmatpush1.msra.mxu0 %v229
    %255 = vmatprep.subr.mxu0 0.0
    %256 = vmatpush1.msra.mxu0 %v230
    %257 = vmatprep.subr.mxu0 0.0
    %258 = vmatpush1.msra.mxu0 %v231
    %259 = vmatprep.subr.mxu0 0.0
    %260 = vmatpush1.msra.mxu0 %v232
    %261 = vmatprep.subr.mxu0 0.0
    %262 = vmatpush1.msra.mxu0 %v233
    %263 = vmatprep.subr.mxu0 0.0
    %264 = vmatpush1.msra.mxu0 %v234
    %265 = vmatprep.subr.mxu0 0.0
    %266 = vmatpush1.msra.mxu0 %v235
    %267 = vmatprep.subr.mxu0 0.0
    %268 = vmatpush1.msra.mxu0 %v236
    %269 = vmatprep.subr.mxu0 0.0
    %270 = vmatpush1.msra.mxu0 %v237
    %271 = vmatprep.subr.mxu0 0.0
    %272 = vmatpush1.msra.mxu0 %v238
    %273 = vmatprep.subr.mxu0 0.0
    %274 = vmatpush1.msra.mxu0 %v239
    %275 = vmatprep.subr.mxu0 0.0
    %276 = vmatpush1.msra.mxu0 %v240
    %277 = vmatprep.subr.mxu0 0.0
    %278 = vmatpush1.msra.mxu0 %v241
    %279 = vmatprep.subr.mxu0 0.0
    %280 = vmatpush1.msra.mxu0 %v242
    %281 = vmatprep.subr.mxu0 0.0
    %282 = vmatpush1.msra.mxu0 %v243
    %283 = vmatprep.subr.mxu0 0.0
    %284 = vmatpush1.msra.mxu0 0.0
    %285 = vmatprep.subr.mxu0 0.0
    %286 = vmatpush1.msra.mxu0 0.0
    %287 = vmatprep.subr.mxu0 0.0
    %288 = vmatpush1.msra.mxu0 0.0
    %289 = vmatprep.subr.mxu0 0.0
    %290 = vmatpush1.msra.mxu0 0.0
    %291 = vmatprep.subr.mxu0 0.0
    %292 = vmatpush1.msra.mxu0 0.0
    %293 = vmatprep.subr.mxu0 0.0
    %294 = vmatpush1.msra.mxu0 0.0
    %295 = vmatprep.subr.mxu0 0.0
    %296 = vmatpush1.msra.mxu0 0.0
    %297 = vmatprep.subr.mxu0 0.0
    %298 = vmatpush1.msra.mxu0 0.0
    %299 = vmatprep.subr.mxu0 0.0
    %300 = vmatpush1.msra.mxu0 0.0
    %301 = vmatprep.subr.mxu0 0.0
    %302 = vmatpush1.msra.mxu0 0.0
    %303 = vmatprep.subr.mxu0 0.0
    %304 = vmatpush1.msra.mxu0 0.0
    %305 = vmatprep.subr.mxu0 0.0
    %306 = vmatpush1.msra.mxu0 0.0
    %307 = vmatprep.subr.mxu0 0.0
    %308 = vmatpush1.msra.mxu0 0.0
    %309 = vmatprep.subr.mxu0 0.0
    %310 = vmatpush1.msra.mxu0 0.0
    %311 = vmatprep.subr.mxu0 0.0
    %312 = vmatpush1.msra.mxu0 0.0
    %313 = vmatprep.subr.mxu0 0.0
    %314 = vmatpush1.msra.mxu0 0.0
    %315 = vmatprep.mubr.f32.mxu0 0.0
    %316 = vmatmul.mubr.f32.gmra.mrb[0].mxu0 %v227
    %v317 = vpop.f32.mrb[0].mxu0
    %v318 = vadd.f32 %v249, %v317
    %v319 = vpop.f32.mrb[0].mxu0
    %320 = vdwg.mxu0
    %v321 = vmax.f32 %v318, 0.0
    %v322 = vld [vmem:[%s7] sm:$0x1]
    %v324 = vlaneseq
    %v325 = vshrl.u32 %v324, 7
    %v326 = vsub.s32 0, %v325
    %v327 = vrot.slane %v322, %v326
    %v329 = vmul.f32 %v321, %v327
    %330 = vadd.xlane.f32.xlu0 %v329
    %v331 = vpop.xlane.xlu0 %330
    %s332 = sld [smem:[#allocation2]]
    %v333 = vstv %s332
    %v334 = vadd.f32 %v331, %v333
    %vm335 = vcmask 7168
    %336 = vst.msk [vmem:[%s9] sm:$0xff] %vm335, %v334
    // Predicated region
    $region46: #{tpu_custom_call.1} parent=1 // pred_check
      _
    $region47: #{tpu_custom_call.1} parent=1 // pred_check_branch
      %338 = sbr.rel (0) target = $region49
    $region48: #{tpu_custom_call.1} parent=1 // pred_region
      _
    $region49: #{tpu_custom_call.1} parent=1 // pred_fallthru
      _
    // Predicated region
    $region50: #{tpu_custom_call.1} parent=1 // pred_check
      _
    $region51: #{tpu_custom_call.1} parent=1 // pred_check_branch
      %340 = sbr.rel (0) target = $region53
    $region52: #{tpu_custom_call.1} parent=1 // pred_region
      _
    $region53: #{tpu_custom_call.1} parent=1 // pred_fallthru
      _
    %341 = vsyncpa [#allocation4], 1
    %342 = vsyncpa [#allocation6], 1

</llo_original>
